<compile_context>
chip_gen: v7x
topology: tpu7x:2x2x1
jax: 0.10.0
libtpu: 0.0.40
codegen_flags: <defaults>
</compile_context>

<pallas_src>
import functools

import jax
import jax.numpy as jnp
from jax import lax
from jax.experimental import pallas as pl
from jax.experimental.pallas import tpu as pltpu


def _combined_loss_kernel(x_ref, t_ref, w_ref, inter_ref, denom_ref, ce_ref,
                          *, hw, tile, mask_tail):
    j = pl.program_id(1)

    @pl.when(j == 0)
    def _():
        inter_ref[...] = jnp.zeros_like(inter_ref)
        denom_ref[...] = jnp.zeros_like(denom_ref)
        ce_ref[...] = jnp.zeros_like(ce_ref)

    x = x_ref[...].astype(jnp.float32)   # (1, C, T) logits: C on sublanes, T on lanes
    t = t_ref[...]                       # (1, 1, T) int32 targets
    w = w_ref[...].astype(jnp.float32)   # (1, 1, T) per-pixel weights

    # softmax over channels (sublane axis)
    m = jnp.max(x, axis=1, keepdims=True)            # (1, 1, T)
    ex = jnp.exp(x - m)                               # (1, C, T)
    s = jnp.sum(ex, axis=1, keepdims=True)            # (1, 1, T)
    soft = ex * pl.reciprocal(s, approx=False)        # (1, C, T)

    # one-hot encoding of the target over channels (== DiceLoss scatter_)
    chan = lax.broadcasted_iota(jnp.int32, x.shape, 1)
    is_t = chan == t                                   # (1, C, T)

    if mask_tail:
        # mask out padded tail pixels (static hw / tile)
        lane = lax.broadcasted_iota(jnp.int32, (1, 1, tile), 2)
        valid = ((j * tile + lane) < hw).astype(jnp.float32)   # (1, 1, T)
        onehot = jnp.where(is_t, valid, 0.0)
        soft_m = soft * valid
        w = w * valid
    else:
        onehot = is_t.astype(jnp.float32)
        soft_m = soft

    # Dice accumulators: lane-wide partial sums (collapsed to per-channel scalars
    # in the JAX glue).  Pure VPU adds, no cross-lane work in the hot loop.
    inter_ref[...] += soft_m * onehot
    denom_ref[...] += soft_m + onehot

    # weighted cross-entropy: (logsumexp(x) - x[target]) * weight, lane-wide partial sum
    lse = m + jnp.log(s)                                     # (1, 1, T)
    logit_t = jnp.sum(x * onehot, axis=1, keepdims=True)     # (1, 1, T)
    ce_ref[...] += (lse - logit_t) * w


def combined_loss(inputx, target, weight, weight_dice=1.0, weight_ce=1.0,
                  tile_hw=2048):
    """inputx: (N, C, H, W) float; target: (N, H, W) int; weight: (N, H, W) float."""
    N, C, H, W = inputx.shape
    HW = H * W

    # Lane-dense layout: pixels on the lane axis, channels on sublanes.
    # These reshapes are free (no transpose) and keep the native dtype in HBM.
    x = inputx.reshape(N, C, HW)
    t = target.reshape(N, 1, HW).astype(jnp.int32)
    w = weight.reshape(N, 1, HW)

    # Pick a lane-dense pixel tile (multiple of 128), capped by the (padded) image.
    tile = max(128, min(int(tile_hw), ((HW + 127) // 128) * 128))
    tile = (tile // 128) * 128
    hw_pad = pl.cdiv(HW, tile) * tile
    if hw_pad != HW:
        pad = hw_pad - HW
        x = jnp.pad(x, ((0, 0), (0, 0), (0, pad)))
        t = jnp.pad(t, ((0, 0), (0, 0), (0, pad)))
        w = jnp.pad(w, ((0, 0), (0, 0), (0, pad)))
    mask_tail = hw_pad != HW

    kernel = functools.partial(_combined_loss_kernel, hw=HW, tile=tile,
                               mask_tail=mask_tail)

    inter, denom, ce_acc = pl.pallas_call(
        kernel,
        out_shape=(
            jax.ShapeDtypeStruct((N, C, tile), jnp.float32),
            jax.ShapeDtypeStruct((N, C, tile), jnp.float32),
            jax.ShapeDtypeStruct((N, 1, tile), jnp.float32),
        ),
        grid_spec=pltpu.PrefetchScalarGridSpec(
            num_scalar_prefetch=0,
            grid=(N, hw_pad // tile),
            in_specs=[
                pl.BlockSpec((1, C, tile), lambda b, j: (b, 0, j)),
                pl.BlockSpec((1, 1, tile), lambda b, j: (b, 0, j)),
                pl.BlockSpec((1, 1, tile), lambda b, j: (b, 0, j)),
            ],
            out_specs=[
                pl.BlockSpec((1, C, tile), lambda b, j: (b, 0, 0)),
                pl.BlockSpec((1, C, tile), lambda b, j: (b, 0, 0)),
                pl.BlockSpec((1, 1, tile), lambda b, j: (b, 0, 0)),
            ],
        ),
        compiler_params=pltpu.CompilerParams(
            # batch axis can be split across TensorCores (v7x); pixel axis accumulates
            dimension_semantics=("parallel", "arbitrary")),
    )(x, t, w)

    # --- scalar glue (matches DiceLoss / CombinedLoss tail exactly) ---
    eps = 0.001
    inter_c = jnp.sum(inter, axis=(0, 2))          # (C,)  sum over N, H, W
    denom_c = jnp.sum(denom, axis=(0, 2)) + eps    # (C,)
    loss_per_channel = 1.0 - 2.0 * inter_c / denom_c
    dice_val = jnp.sum(loss_per_channel) / C       # torch.mean of a scalar
    ce_val = jnp.sum(ce_acc) / (N * HW)            # mean over real N*H*W pixels
    total = weight_dice * dice_val + weight_ce * ce_val
    return total, dice_val, ce_val


def _reference(inputx, target, weight, weight_dice=1.0, weight_ce=1.0):
    """Pure-JAX reference mirroring the PyTorch CombinedLoss semantics."""
    N, C, H, W = inputx.shape
    x = inputx.astype(jnp.float32)
    soft = jax.nn.softmax(x, axis=1)
    onehot = jnp.transpose(
        jax.nn.one_hot(target, C, dtype=jnp.float32), (0, 3, 1, 2))
    eps = 0.001
    numerator = 2.0 * jnp.sum(soft * onehot, axis=(0, 2, 3))
    denominator = jnp.sum(soft + onehot, axis=(0, 2, 3)) + eps
    dice_val = jnp.sum(1.0 - numerator / denominator) / C
    logp = jax.nn.log_softmax(x, axis=1)
    ce = -jnp.take_along_axis(logp, target[:, None].astype(jnp.int32), axis=1)[:, 0]
    ce_val = jnp.mean(ce * weight)
    total = weight_dice * dice_val + weight_ce * ce_val
    return total, dice_val, ce_val


if __name__ == "__main__":
    key = jax.random.PRNGKey(0)

    # first shape exercises the even-tile path, second exercises the masked tail path
    for (N, C, H, W) in [(2, 4, 16, 16), (2, 4, 13, 13)]:
        k1, k2, k3 = jax.random.split(jax.random.fold_in(key, H), 3)
        inputx = jax.random.normal(k1, (N, C, H, W), dtype=jnp.float32)
        target = jax.random.randint(k2, (N, H, W), 0, C, dtype=jnp.int32)
        weight = jax.random.uniform(k3, (N, H, W), dtype=jnp.float32)

        total, dice_val, ce_val = combined_loss(inputx, target, weight)
        jax.block_until_ready((total, dice_val, ce_val))

        ref_total, ref_dice, ref_ce = _reference(inputx, target, weight)
        assert jnp.allclose(dice_val, ref_dice, atol=1e-5), (dice_val, ref_dice)
        assert jnp.allclose(ce_val, ref_ce, atol=1e-5), (ce_val, ref_ce)
        assert jnp.allclose(total, ref_total, atol=1e-5), (total, ref_total)

    print("KERNEL_OK")
</pallas_src>

<mosaic_0001>
module attributes {stable_mosaic.version = 11 : i64} {
  func.func @_combined_loss_kernel(%arg0: i32, %arg1: i32, %arg2: memref<1x4x256xf32, #tpu.memory_space<vmem>>, %arg3: memref<1x1x256xi32, #tpu.memory_space<vmem>>, %arg4: memref<1x1x256xf32, #tpu.memory_space<vmem>>, %arg5: memref<1x4x256xf32, #tpu.memory_space<vmem>>, %arg6: memref<1x4x256xf32, #tpu.memory_space<vmem>>, %arg7: memref<1x1x256xf32, #tpu.memory_space<vmem>>) attributes {dimension_semantics = [#tpu.dimension_semantics<parallel>, #tpu.dimension_semantics<arbitrary>], iteration_bounds = array<i64: 2, 1>, scalar_prefetch = 0 : i64, scratch_operands = 0 : i64, tpu.core_type = #tpu.core_type<tc>, window_params = [{transform_indices = @transform_0, window_bounds = array<i64: 1, 4, 256>}, {transform_indices = @transform_1, window_bounds = array<i64: 1, 1, 256>}, {transform_indices = @transform_2, window_bounds = array<i64: 1, 1, 256>}, {transform_indices = @transform_3, window_bounds = array<i64: 1, 4, 256>}, {transform_indices = @transform_4, window_bounds = array<i64: 1, 4, 256>}, {transform_indices = @transform_5, window_bounds = array<i64: 1, 1, 256>}]} {
    %c0_i32 = arith.constant 0 : i32
    %0 = arith.cmpi eq, %arg1, %c0_i32 : i32
    %1 = arith.extui %0 : i1 to i32
    %c0_i32_0 = arith.constant 0 : i32
    %2 = arith.cmpi ne, %1, %c0_i32_0 : i32
    scf.if %2 {
      %cst_29 = arith.constant 0.000000e+00 : f32
      %39 = vector.broadcast %cst_29 : f32 to vector<1x4x256xf32>
      %c0_30 = arith.constant 0 : index
      %c0_31 = arith.constant 0 : index
      %c0_32 = arith.constant 0 : index
      %40 = vector.load %arg5[%c0_30, %c0_31, %c0_32] : memref<1x4x256xf32, #tpu.memory_space<vmem>>, vector<1x4x256xf32>
      tpu.vector_store %arg5[%c0_30, %c0_31, %c0_32], %39 {strides = array<i32>} : memref<1x4x256xf32, #tpu.memory_space<vmem>>, vector<1x4x256xf32>,
      %cst_33 = arith.constant 0.000000e+00 : f32
      %41 = vector.broadcast %cst_33 : f32 to vector<1x4x256xf32>
      %c0_34 = arith.constant 0 : index
      %c0_35 = arith.constant 0 : index
      %c0_36 = arith.constant 0 : index
      %42 = vector.load %arg6[%c0_34, %c0_35, %c0_36] : memref<1x4x256xf32, #tpu.memory_space<vmem>>, vector<1x4x256xf32>
      tpu.vector_store %arg6[%c0_34, %c0_35, %c0_36], %41 {strides = array<i32>} : memref<1x4x256xf32, #tpu.memory_space<vmem>>, vector<1x4x256xf32>,
      %cst_37 = arith.constant 0.000000e+00 : f32
      %43 = vector.broadcast %cst_37 : f32 to vector<1x1x256xf32>
      %c0_38 = arith.constant 0 : index
      %c0_39 = arith.constant 0 : index
      %c0_40 = arith.constant 0 : index
      %44 = vector.load %arg7[%c0_38, %c0_39, %c0_40] : memref<1x1x256xf32, #tpu.memory_space<vmem>>, vector<1x1x256xf32>
      tpu.vector_store %arg7[%c0_38, %c0_39, %c0_40], %43 {strides = array<i32>} : memref<1x1x256xf32, #tpu.memory_space<vmem>>, vector<1x1x256xf32>,
    } else {
    }
    %c0 = arith.constant 0 : index
    %c0_1 = arith.constant 0 : index
    %c0_2 = arith.constant 0 : index
    %3 = vector.load %arg2[%c0, %c0_1, %c0_2] : memref<1x4x256xf32, #tpu.memory_space<vmem>>, vector<1x4x256xf32>
    %c0_3 = arith.constant 0 : index
    %c0_4 = arith.constant 0 : index
    %c0_5 = arith.constant 0 : index
    %4 = vector.load %arg3[%c0_3, %c0_4, %c0_5] : memref<1x1x256xi32, #tpu.memory_space<vmem>>, vector<1x1x256xi32>
    %c0_6 = arith.constant 0 : index
    %c0_7 = arith.constant 0 : index
    %c0_8 = arith.constant 0 : index
    %5 = vector.load %arg4[%c0_6, %c0_7, %c0_8] : memref<1x1x256xf32, #tpu.memory_space<vmem>>, vector<1x1x256xf32>
    %cst = arith.constant dense<0xFF800000> : vector<1x256xf32>
    %6 = vector.multi_reduction <maximumf>, %3, %cst [1] : vector<1x4x256xf32> to vector<1x256xf32>
    %7 = vector.shape_cast %6 : vector<1x256xf32> to vector<1x1x256xf32>
    %8 = vector.broadcast %7 : vector<1x1x256xf32> to vector<1x4x256xf32>
    %9 = arith.subf %3, %8 : vector<1x4x256xf32>
    %10 = math.exp %9 : vector<1x4x256xf32>
    %cst_9 = arith.constant dense<0.000000e+00> : vector<1x256xf32>
    %11 = vector.multi_reduction <add>, %10, %cst_9 [1] : vector<1x4x256xf32> to vector<1x256xf32>
    %12 = vector.shape_cast %11 : vector<1x256xf32> to vector<1x1x256xf32>
    %13 = tpu.reciprocal %12 : vector<1x1x256xf32> -> vector<1x1x256xf32>
    %14 = vector.broadcast %13 : vector<1x1x256xf32> to vector<1x4x256xf32>
    %15 = arith.mulf %10, %14 : vector<1x4x256xf32>
    %16 = tpu.iota {dimensions = array<i32: 1>} : vector<1x4x256xi32>
    %17 = vector.broadcast %4 : vector<1x1x256xi32> to vector<1x4x256xi32>
    %18 = arith.cmpi eq, %16, %17 : vector<1x4x256xi32>
    %19 = arith.extui %18 : vector<1x4x256xi1> to vector<1x4x256xi32>
    %20 = arith.sitofp %19 : vector<1x4x256xi32> to vector<1x4x256xf32>
    %c0_10 = arith.constant 0 : index
    %c0_11 = arith.constant 0 : index
    %c0_12 = arith.constant 0 : index
    %21 = vector.load %arg5[%c0_10, %c0_11, %c0_12] : memref<1x4x256xf32, #tpu.memory_space<vmem>>, vector<1x4x256xf32>
    %22 = arith.mulf %15, %20 : vector<1x4x256xf32>
    %23 = arith.addf %21, %22 : vector<1x4x256xf32>
    %c0_13 = arith.constant 0 : index
    %c0_14 = arith.constant 0 : index
    %c0_15 = arith.constant 0 : index
    %24 = vector.load %arg5[%c0_13, %c0_14, %c0_15] : memref<1x4x256xf32, #tpu.memory_space<vmem>>, vector<1x4x256xf32>
    tpu.vector_store %arg5[%c0_13, %c0_14, %c0_15], %23 {strides = array<i32>} : memref<1x4x256xf32, #tpu.memory_space<vmem>>, vector<1x4x256xf32>,
    %c0_16 = arith.constant 0 : index
    %c0_17 = arith.constant 0 : index
    %c0_18 = arith.constant 0 : index
    %25 = vector.load %arg6[%c0_16, %c0_17, %c0_18] : memref<1x4x256xf32, #tpu.memory_space<vmem>>, vector<1x4x256xf32>
    %26 = arith.addf %15, %20 : vector<1x4x256xf32>
    %27 = arith.addf %25, %26 : vector<1x4x256xf32>
    %c0_19 = arith.constant 0 : index
    %c0_20 = arith.constant 0 : index
    %c0_21 = arith.constant 0 : index
    %28 = vector.load %arg6[%c0_19, %c0_20, %c0_21] : memref<1x4x256xf32, #tpu.memory_space<vmem>>, vector<1x4x256xf32>
    tpu.vector_store %arg6[%c0_19, %c0_20, %c0_21], %27 {strides = array<i32>} : memref<1x4x256xf32, #tpu.memory_space<vmem>>, vector<1x4x256xf32>,
    %29 = math.log %12 : vector<1x1x256xf32>
    %30 = arith.addf %7, %29 : vector<1x1x256xf32>
    %31 = arith.mulf %3, %20 : vector<1x4x256xf32>
    %cst_22 = arith.constant dense<0.000000e+00> : vector<1x256xf32>
    %32 = vector.multi_reduction <add>, %31, %cst_22 [1] : vector<1x4x256xf32> to vector<1x256xf32>
    %33 = vector.shape_cast %32 : vector<1x256xf32> to vector<1x1x256xf32>
    %c0_23 = arith.constant 0 : index
    %c0_24 = arith.constant 0 : index
    %c0_25 = arith.constant 0 : index
    %34 = vector.load %arg7[%c0_23, %c0_24, %c0_25] : memref<1x1x256xf32, #tpu.memory_space<vmem>>, vector<1x1x256xf32>
    %35 = arith.subf %30, %33 : vector<1x1x256xf32>
    %36 = arith.mulf %35, %5 : vector<1x1x256xf32>
    %37 = arith.addf %34, %36 : vector<1x1x256xf32>
    %c0_26 = arith.constant 0 : index
    %c0_27 = arith.constant 0 : index
    %c0_28 = arith.constant 0 : index
    %38 = vector.load %arg7[%c0_26, %c0_27, %c0_28] : memref<1x1x256xf32, #tpu.memory_space<vmem>>, vector<1x1x256xf32>
    tpu.vector_store %arg7[%c0_26, %c0_27, %c0_28], %37 {strides = array<i32>} : memref<1x1x256xf32, #tpu.memory_space<vmem>>, vector<1x1x256xf32>,
    return
  }
  func.func @transform_0(%arg0: i32, %arg1: i32) -> (i32, i32, i32) {
    %c0_i32 = arith.constant 0 : i32
    %c0_i32_0 = arith.constant 0 : i32
    return %arg0, %c0_i32, %arg1 : i32, i32, i32
  }
  func.func @transform_1(%arg0: i32, %arg1: i32) -> (i32, i32, i32) {
    %c0_i32 = arith.constant 0 : i32
    %c0_i32_0 = arith.constant 0 : i32
    return %arg0, %c0_i32, %arg1 : i32, i32, i32
  }
  func.func @transform_2(%arg0: i32, %arg1: i32) -> (i32, i32, i32) {
    %c0_i32 = arith.constant 0 : i32
    %c0_i32_0 = arith.constant 0 : i32
    return %arg0, %c0_i32, %arg1 : i32, i32, i32
  }
  func.func @transform_3(%arg0: i32, %arg1: i32) -> (i32, i32, i32) {
    %c0_i32 = arith.constant 0 : i32
    %c0_i32_0 = arith.constant 0 : i32
    %c0_i32_1 = arith.constant 0 : i32
    return %arg0, %c0_i32, %c0_i32_0 : i32, i32, i32
  }
  func.func @transform_4(%arg0: i32, %arg1: i32) -> (i32, i32, i32) {
    %c0_i32 = arith.constant 0 : i32
    %c0_i32_0 = arith.constant 0 : i32
    %c0_i32_1 = arith.constant 0 : i32
    return %arg0, %c0_i32, %c0_i32_0 : i32, i32, i32
  }
  func.func @transform_5(%arg0: i32, %arg1: i32) -> (i32, i32, i32) {
    %c0_i32 = arith.constant 0 : i32
    %c0_i32_0 = arith.constant 0 : i32
    %c0_i32_1 = arith.constant 0 : i32
    return %arg0, %c0_i32, %c0_i32_0 : i32, i32, i32
  }
}

</mosaic_0001>

<llo_original>
// kernel: tpu_custom_call.1
$region0: #{tpu_custom_call.1}
  #allocation0 [shape = 'u32[]', space=smem, size = 0x4, offset = 0x4, fixed_abs, tag = 'smem constant byte address 0x4 - core index']
  #allocation1 [shape = 'u32[144,128]{1,0:T(1,128)}', space=vmem, size = 0x12000, scoped, tag = 'internal scratch']
  %s0 = inlined_call_operand.hbm [shape: f32[2,4,256], index: 0, kind: input, shape index: {}]
  %s1 = inlined_call_operand.hbm [shape: s32[2,1,256], index: 1, kind: input, shape index: {}]
  %s2 = inlined_call_operand.vmem [shape: f32[2,1,256], index: 2, kind: input, shape index: {}]
  %s3 = inlined_call_operand.hbm [shape: f32[2,4,256], index: 3, kind: output, shape index: {0}]
  %s4 = inlined_call_operand.hbm [shape: f32[2,4,256], index: 4, kind: output, shape index: {1}]
  %s5 = inlined_call_operand.hbm [shape: f32[2,1,256], index: 5, kind: output, shape index: {2}]
  %6 = xla_tuple %s3, %s4, %s5
  %s7 = sld [smem:[#allocation0]]
  $region73: #{tpu_custom_call.1} parent=0
    _
  %s9 = ssub.s32 1, %s7
  %s10 = scalar_select 0, %s9, %s7
  $region1: #{tpu_custom_call.1} parent=0
    #allocation2 [shape = 'u8[8192]{0}', space=vmem, size = 0x2000, scoped, tag = 'input window, operand 0']
    #allocation3 [shape = 's32[2]{0}', space=sflag, size = 0x8, scoped, tag = 'scoped memory for tpu_custom_call.1']
    #allocation4 [shape = 's32[2]{0}', space=sflag, size = 0x8, scoped, tag = 'scoped memory for tpu_custom_call.1']
    #allocation5 [shape = 'u8[2048]{0}', space=vmem, size = 0x800, scoped, tag = 'input window, operand 1']
    #allocation6 [shape = 's32[2]{0}', space=sflag, size = 0x8, scoped, tag = 'scoped memory for tpu_custom_call.1']
    #allocation7 [shape = 'u8[8192]{0}', space=vmem, size = 0x2000, scoped, tag = 'output window, operand 0']
    #allocation8 [shape = 'u8[8192]{0}', space=vmem, size = 0x2000, scoped, tag = 'output window, operand 1']
    #allocation9 [shape = 's32[2]{0}', space=sflag, size = 0x8, scoped, tag = 'scoped memory for tpu_custom_call.1']
    #allocation10 [shape = 'u8[2048]{0}', space=vmem, size = 0x800, scoped, tag = 'output window, operand 2']
    %11 = vsyncpa [#allocation3], 0
    %s12 = scalar_lea.sflag [#allocation3], 1
    %13 = vsyncpa %s12, 0
    %14 = vsyncpa [#allocation6], 0
    %s15 = scalar_lea.sflag [#allocation6], 1
    %16 = vsyncpa %s15, 0
    %17 = vsyncpa [#allocation4], 0
    %s18 = scalar_lea.sflag [#allocation4], 1
    %19 = vsyncpa %s18, 0
    %20 = vsyncpa [#allocation9], 0
    %s21 = scalar_lea.sflag [#allocation9], 1
    %22 = vsyncpa %s21, 0
    loop: start=0, step=1, limit=4
    $region2: #{tpu_custom_call.1} parent=1 // loop_pre_header
      _
    $region3: #{tpu_custom_call.1} parent=1 // loop_header
      %s24 = sphi 0, %s28
      %p25 = scmp.ge.s32.totalorder %s24, 4
      %s31 = sphi 0, %s43
      %s32 = sphi 0, %s39
      %s33 = sphi 0, %s31
      %s34 = sphi 0, %s32
      %s35 = sphi 0, %s33
      %s36 = sphi 0, %s34
      %s48 = sphi 0, %s50
      %s51 = sphi 0, %s48
      %s52 = sphi 0, %s51
      %s68 = sphi 0, %s52
      %s76 = sphi 0, %s78
      %s79 = sphi 0, %s76
      %s80 = sphi 0, %s79
      %s96 = sphi 0, %s80
      %s104 = sphi 0, %s106
      %s107 = sphi 0, %s104
      %s108 = sphi 0, %s107
      %s124 = sphi 0, %s108
      %s130 = sphi 0, %s132
      %s133 = sphi 0, %s130
      %s134 = sphi 0, %s133
      %s150 = sphi 0, %s134
      %s156 = sphi 0, %s158
      %s159 = sphi 0, %s156
      %s160 = sphi 0, %s159
      %s176 = sphi 0, %s160
      %s182 = sphi 0, %s184
      %s185 = sphi 0, %s182
      %s186 = sphi 0, %s185
      %s202 = sphi 0, %s186
    $region4: #{tpu_custom_call.1} parent=1 // loop_header_branch
      %27 = sbr.rel (%p25) target = $region8
    $region5: #{tpu_custom_call.1} parent=1 // loop_body
      %s29 = ssub.s32 %s24, 1
      %s30 = ssub.s32 %s24, 2
      %s37 = sadd.s32 1, %s32
      %p38 = scmp.ge.s32.totalorder %s37, 1
      %s39 = scalar_select %p38, 0, %s37
      %s40 = sadd.s32 1, %s31
      %s41 = scalar_select %p38, %s40, %s31
      %p42 = scmp.ge.s32.totalorder %s41, 2
      %s43 = scalar_select %p42, 0, %s41
      %s44 = ssub.s32 %s31, %s43
      %s45 = ssub.s32 %s32, %s39
      %s46 = sor.u32 %s44, %s45
      %p47 = scmp.eq.s32.totalorder %s46, 0
      %s49 = sadd.s32 %s48, 1
      %s50 = scalar_select %p47, %s48, %s49
      %p53 = pneg %p47
      %p54 = scmp.eq.s32.totalorder %s24, 1
      %p55 = por %p53, %p54
      %p56 = scmp.ne.s32.totalorder %s48, %s51
      %p57 = scmp.eq.s32.totalorder %s24, 0
      %p58 = por %p56, %p57
      %p59 = scmp.ne.s32.totalorder %s48, %s51
      %p60 = scmp.eq.s32.totalorder %s29, 1
      %p61 = por %p59, %p60
      %p62 = scmp.ne.s32.totalorder %s51, %s52
      %p63 = scmp.eq.s32.totalorder %s29, 0
      %p64 = por %p62, %p63
      %p65 = scmp.ne.s32.totalorder %s51, %s52
      %p66 = scmp.eq.s32.totalorder %s30, 1
      %p67 = por %p65, %p66
      %p69 = scmp.ne.s32.totalorder %s52, %s68
      %p70 = scmp.eq.s32.totalorder %s30, 0
      %p71 = por %p69, %p70
      %s72 = ssub.s32 %s31, %s43
      %s73 = ssub.s32 %s32, %s39
      %s74 = sor.u32 %s72, %s73
      %p75 = scmp.eq.s32.totalorder %s74, 0
      %s77 = sadd.s32 %s76, 1
      %s78 = scalar_select %p75, %s76, %s77
      %p81 = pneg %p75
      %p82 = scmp.eq.s32.totalorder %s24, 1
      %p83 = por %p81, %p82
      %p84 = scmp.ne.s32.totalorder %s76, %s79
      %p85 = scmp.eq.s32.totalorder %s24, 0
      %p86 = por %p84, %p85
      %p87 = scmp.ne.s32.totalorder %s76, %s79
      %p88 = scmp.eq.s32.totalorder %s29, 1
      %p89 = por %p87, %p88
      %p90 = scmp.ne.s32.totalorder %s79, %s80
      %p91 = scmp.eq.s32.totalorder %s29, 0
      %p92 = por %p90, %p91
      %p93 = scmp.ne.s32.totalorder %s79, %s80
      %p94 = scmp.eq.s32.totalorder %s30, 1
      %p95 = por %p93, %p94
      %p97 = scmp.ne.s32.totalorder %s80, %s96
      %p98 = scmp.eq.s32.totalorder %s30, 0
      %p99 = por %p97, %p98
      %s100 = ssub.s32 %s31, %s43
      %s101 = ssub.s32 %s32, %s39
      %s102 = sor.u32 %s100, %s101
      %p103 = scmp.eq.s32.totalorder %s102, 0
      %s105 = sadd.s32 %s104, 1
      %s106 = scalar_select %p103, %s104, %s105
      %p109 = pneg %p103
      %p110 = scmp.eq.s32.totalorder %s24, 1
      %p111 = por %p109, %p110
      %p112 = scmp.ne.s32.totalorder %s104, %s107
      %p113 = scmp.eq.s32.totalorder %s24, 0
      %p114 = por %p112, %p113
      %p115 = scmp.ne.s32.totalorder %s104, %s107
      %p116 = scmp.eq.s32.totalorder %s29, 1
      %p117 = por %p115, %p116
      %p118 = scmp.ne.s32.totalorder %s107, %s108
      %p119 = scmp.eq.s32.totalorder %s29, 0
      %p120 = por %p118, %p119
      %p121 = scmp.ne.s32.totalorder %s107, %s108
      %p122 = scmp.eq.s32.totalorder %s30, 1
      %p123 = por %p121, %p122
      %p125 = scmp.ne.s32.totalorder %s108, %s124
      %p126 = scmp.eq.s32.totalorder %s30, 0
      %p127 = por %p125, %p126
      %s128 = ssub.s32 %s31, %s43
      %p129 = scmp.eq.s32.totalorder %s128, 0
      %s131 = sadd.s32 %s130, 1
      %s132 = scalar_select %p129, %s130, %s131
      %p135 = pneg %p129
      %p136 = scmp.eq.s32.totalorder %s24, 1
      %p137 = por %p135, %p136
      %p138 = scmp.ne.s32.totalorder %s130, %s133
      %p139 = scmp.eq.s32.totalorder %s24, 0
      %p140 = por %p138, %p139
      %p141 = scmp.ne.s32.totalorder %s130, %s133
      %p142 = scmp.eq.s32.totalorder %s29, 1
      %p143 = por %p141, %p142
      %p144 = scmp.ne.s32.totalorder %s133, %s134
      %p145 = scmp.eq.s32.totalorder %s29, 0
      %p146 = por %p144, %p145
      %p147 = scmp.ne.s32.totalorder %s133, %s134
      %p148 = scmp.eq.s32.totalorder %s30, 1
      %p149 = por %p147, %p148
      %p151 = scmp.ne.s32.totalorder %s134, %s150
      %p152 = scmp.eq.s32.totalorder %s30, 0
      %p153 = por %p151, %p152
      %s154 = ssub.s32 %s31, %s43
      %p155 = scmp.eq.s32.totalorder %s154, 0
      %s157 = sadd.s32 %s156, 1
      %s158 = scalar_select %p155, %s156, %s157
      %p161 = pneg %p155
      %p162 = scmp.eq.s32.totalorder %s24, 1
      %p163 = por %p161, %p162
      %p164 = scmp.ne.s32.totalorder %s156, %s159
      %p165 = scmp.eq.s32.totalorder %s24, 0
      %p166 = por %p164, %p165
      %p167 = scmp.ne.s32.totalorder %s156, %s159
      %p168 = scmp.eq.s32.totalorder %s29, 1
      %p169 = por %p167, %p168
      %p170 = scmp.ne.s32.totalorder %s159, %s160
      %p171 = scmp.eq.s32.totalorder %s29, 0
      %p172 = por %p170, %p171
      %p173 = scmp.ne.s32.totalorder %s159, %s160
      %p174 = scmp.eq.s32.totalorder %s30, 1
      %p175 = por %p173, %p174
      %p177 = scmp.ne.s32.totalorder %s160, %s176
      %p178 = scmp.eq.s32.totalorder %s30, 0
      %p179 = por %p177, %p178
      %s180 = ssub.s32 %s31, %s43
      %p181 = scmp.eq.s32.totalorder %s180, 0
      %s183 = sadd.s32 %s182, 1
      %s184 = scalar_select %p181, %s182, %s183
      %p187 = pneg %p181
      %p188 = scmp.eq.s32.totalorder %s24, 1
      %p189 = por %p187, %p188
      %p190 = scmp.ne.s32.totalorder %s182, %s185
      %p191 = scmp.eq.s32.totalorder %s24, 0
      %p192 = por %p190, %p191
      %p193 = scmp.ne.s32.totalorder %s182, %s185
      %p194 = scmp.eq.s32.totalorder %s29, 1
      %p195 = por %p193, %p194
      %p196 = scmp.ne.s32.totalorder %s185, %s186
      %p197 = scmp.eq.s32.totalorder %s29, 0
      %p198 = por %p196, %p197
      %p199 = scmp.ne.s32.totalorder %s185, %s186
      %p200 = scmp.eq.s32.totalorder %s30, 1
      %p201 = por %p199, %p200
      %p203 = scmp.ne.s32.totalorder %s186, %s202
      %p204 = scmp.eq.s32.totalorder %s30, 0
      %p205 = por %p203, %p204
      %p206 = scmp.le.s32.totalorder 1, %s24
      %p207 = scmp.lt.s32.totalorder %s24, 3
      %p208 = pnand %p206, %p207
      %p209 = pneg %p208
      // Predicated region
      $region9: #{tpu_custom_call.1} parent=5 // pred_check
        _
      $region10: #{tpu_custom_call.1} parent=5 // pred_check_branch
        %211 = sbr.rel (%p208) target = $region12
      $region11: #{tpu_custom_call.1} parent=5 // pred_region
        %s212 = ssub.s32 %s24, 1
      $region12: #{tpu_custom_call.1} parent=5 // pred_fallthru
        _
      %p213 = scmp.lt.s32.totalorder %s24, 2
      // Predicated region
      $region13: #{tpu_custom_call.1} parent=5 // pred_check
        %p214 = pneg %p213
      $region14: #{tpu_custom_call.1} parent=5 // pred_check_branch
        %216 = sbr.rel (%p214) target = $region16
      $region15: #{tpu_custom_call.1} parent=5 // pred_region
        // Predicated region
        $region17: #{tpu_custom_call.1} parent=15 // pred_check
          %p217 = pneg %p58
        $region18: #{tpu_custom_call.1} parent=15 // pred_check_branch
          %219 = sbr.rel (%p217) target = $region20
        $region19: #{tpu_custom_call.1} parent=15 // pred_region
          %s220 = sand.u32 %s48, 1
          %s221 = scalar_lea.sflag [#allocation3], %s220
          %s222 = sand.u32 %s48, 1
          %s223 = smul.addr %s222, 8
          %s224 = scalar_lea.vmem [#allocation2], %s223
          %s225 = smul.u32 2, %s32
          %s227 = ssub.s32 128, 128
          %228 = vsyncadd %s221, %s227
          %s229 = smul.addr %s31, 2
          %s230 = sadd.s32 %s225, %s229
          %s231 = smul.addr %s230, 64
          %s232 = scalar_lea.hbm %s0, %s231
          %s234 = sshll.u32 %s224, 4
          %s235 = int_to_ptr.vmem [resolvable:$true] %s234
          %237 = dma.hbm_to_vmem [thread:$0]  %s232, 128, %s235, %s221
        $region20: #{tpu_custom_call.1} parent=15 // pred_fallthru
          _
        // Predicated region
        $region21: #{tpu_custom_call.1} parent=15 // pred_check
          %p238 = pneg %p86
        $region22: #{tpu_custom_call.1} parent=15 // pred_check_branch
          %240 = sbr.rel (%p238) target = $region24
        $region23: #{tpu_custom_call.1} parent=15 // pred_region
          %s241 = sand.u32 %s76, 1
          %s242 = scalar_lea.sflag [#allocation6], %s241
          %s243 = sand.u32 %s76, 1
          %s244 = smul.addr %s243, 2
          %s245 = scalar_lea.vmem [#allocation5], %s244
          %s246 = smul.u32 2, %s32
          %s248 = ssub.s32 32, 32
          %249 = vsyncadd %s242, %s248
          %s250 = smul.addr %s31, 2
          %s251 = sadd.s32 %s246, %s250
          %s252 = smul.addr %s251, 16
          %s253 = scalar_lea.hbm %s1, %s252
          %s255 = sshll.u32 %s245, 4
          %s256 = int_to_ptr.vmem [resolvable:$true] %s255
          %258 = dma.hbm_to_vmem [thread:$0]  %s253, 32, %s256, %s242
        $region24: #{tpu_custom_call.1} parent=15 // pred_fallthru
          _
        // Predicated region
        $region25: #{tpu_custom_call.1} parent=15 // pred_check
          %p259 = pneg %p114
        $region26: #{tpu_custom_call.1} parent=15 // pred_check_branch
          %261 = sbr.rel (%p259) target = $region28
        $region27: #{tpu_custom_call.1} parent=15 // pred_region
          %s262 = smul.u32 2, %s32
          %p263 = scmp.lt.s32.totalorder %s31, 1
          %s264 = scalar_select %p263, %s31, 1
          %p265 = scmp.lt.s32.totalorder %s262, 1
          %s266 = scalar_select %p265, %s262, 1
          %s267 = smul.addr %s264, 2
          %s268 = sadd.s32 %s266, %s267
          %s269 = scalar_lea.vmem %s2, %s268
          %s270 = smul.u32 2, %s32
        $region28: #{tpu_custom_call.1} parent=15 // pred_fallthru
          _
      $region16: #{tpu_custom_call.1} parent=5 // pred_fallthru
        _
      %p271 = scmp.le.s32.totalorder 1, %s24
      %p272 = scmp.lt.s32.totalorder %s24, 3
      %p273 = pnand %p271, %p272
      %p274 = pneg %p273
      // Predicated region
      $region29: #{tpu_custom_call.1} parent=5 // pred_check
        _
      $region30: #{tpu_custom_call.1} parent=5 // pred_check_branch
        %276 = sbr.rel (%p273) target = $region32
      $region31: #{tpu_custom_call.1} parent=5 // pred_region
        %s277 = ssub.s32 %s24, 1
        %s278 = sand.u32 %s51, 1
        %s279 = scalar_lea.sflag [#allocation3], %s278
        %s280 = sand.u32 %s51, 1
        %s281 = smul.addr %s280, 8
        %s282 = scalar_lea.vmem [#allocation2], %s281
        // Predicated region
        $region33: #{tpu_custom_call.1} parent=31 // pred_check
          %p283 = pneg %p64
        $region34: #{tpu_custom_call.1} parent=31 // pred_check_branch
          %285 = sbr.rel (%p283) target = $region36
        $region35: #{tpu_custom_call.1} parent=31 // pred_region
          %286 = dma.done %s279, 128
        $region36: #{tpu_custom_call.1} parent=31 // pred_fallthru
          _
        %s287 = sand.u32 %s79, 1
        %s288 = scalar_lea.sflag [#allocation6], %s287
        %s289 = sand.u32 %s79, 1
        %s290 = smul.addr %s289, 2
        %s291 = scalar_lea.vmem [#allocation5], %s290
        // Predicated region
        $region37: #{tpu_custom_call.1} parent=31 // pred_check
          %p292 = pneg %p92
        $region38: #{tpu_custom_call.1} parent=31 // pred_check_branch
          %294 = sbr.rel (%p292) target = $region40
        $region39: #{tpu_custom_call.1} parent=31 // pred_region
          %295 = dma.done %s288, 32
        $region40: #{tpu_custom_call.1} parent=31 // pred_fallthru
          _
        %s296 = sand.u32 %s51, 1
        %s297 = scalar_lea.sflag [#allocation3], %s296
        %s298 = sand.u32 %s51, 1
        %s299 = smul.addr %s298, 8
        %s300 = scalar_lea.vmem [#allocation2], %s299
        %p301 = pneg %p64
        %p302 = pneg %p61
        %s303 = sand.u32 %s79, 1
        %s304 = scalar_lea.sflag [#allocation6], %s303
        %s305 = sand.u32 %s79, 1
        %s306 = smul.addr %s305, 2
        %s307 = scalar_lea.vmem [#allocation5], %s306
        %p308 = pneg %p92
        %p309 = pneg %p89
        %s310 = smul.u32 2, %s34
        %p311 = scmp.lt.s32.totalorder %s33, 1
        %s312 = scalar_select %p311, %s33, 1
        %p313 = scmp.lt.s32.totalorder %s310, 1
        %s314 = scalar_select %p313, %s310, 1
        %s315 = smul.addr %s312, 2
        %s316 = sadd.s32 %s314, %s315
        %s317 = scalar_lea.vmem %s2, %s316
        %p318 = pneg %p120
        %p319 = pneg %p117
        %p320 = pneg %p146
        %p321 = pneg %p143
        %s322 = sand.u32 %s133, 1
        %s323 = scalar_lea.sflag [#allocation4], %s322
        %s324 = sand.u32 %s133, 1
        %s325 = smul.addr %s324, 8
        %s326 = scalar_lea.vmem [#allocation7], %s325
        %p327 = pneg %p172
        %p328 = pneg %p169
        %s329 = sand.u32 %s29, 1
        %s330 = scalar_lea.sflag [#allocation9], %s329
        %s331 = sand.u32 %s159, 1
        %s332 = smul.addr %s331, 8
        %s333 = scalar_lea.vmem [#allocation8], %s332
        %p334 = pneg %p198
        %p335 = pneg %p195
        %s336 = sand.u32 %s29, 1
        %s337 = scalar_lea.sflag [#allocation9], %s336
        %s338 = sand.u32 %s185, 1
        %s339 = smul.addr %s338, 2
        %s340 = scalar_lea.vmem [#allocation10], %s339
        %s341 = smul.u32 2, %s34
        %s342 = smul.u32 2, %s34
        %s343 = smul.u32 2, %s34
        %p344 = scmp.lt.s32.totalorder %s33, 1
        %s345 = scalar_select %p344, %s33, 1
        %p346 = scmp.lt.s32.totalorder %s343, 1
        %s347 = scalar_select %p346, %s343, 1
        %s348 = smul.addr %s345, 2
        %s349 = sadd.s32 %s347, %s348
        %s350 = scalar_lea.vmem %s2, %s349
        %s351 = smul.u32 2, %s34
        %p352 = scmp.eq.s32.totalorder %s34, 0
        // Predicated region
        $region41: #{tpu_custom_call.1} parent=31 // pred_check
          %p353 = pneg %p352
        $region42: #{tpu_custom_call.1} parent=31 // pred_check_branch
          %355 = sbr.rel (%p353) target = $region44
        $region43: #{tpu_custom_call.1} parent=31 // pred_region
          %356 = vst [vmem:[%s326] sm:$0xff] 0.0
          %357 = vst [vmem:[%s333] sm:$0xff] 0.0
          %v358 = vlaneseq
          %vm359 = vcmp.ge.s32.totalorder %v358, 0
          %vm360 = vcmp.lt.s32.totalorder %v358, 256
          %vm361 = vmand %vm359, %vm360
          %362 = vst.msk [vmem:[%s340] sm:$0x3] %vm361, 0.0
        $region44: #{tpu_custom_call.1} parent=31 // pred_fallthru
          _
        %v363 = vld [vmem:[%s282] sm:$0xff]
        %v364 = vld [vmem:[%s291] sm:$0x3]
        %v365 = vld [vmem:[%s350] sm:$0x3]
        %v367 = vcombine.high %v363, %v363
        %vm369 = vcmask 1043456
        %v370 = vsel %vm369, %v363, -inf
        %v371 = vrot.slane %v370, 4
        %v372 = vmax.f32 %v370, %v371
        %v373 = vrot.slane %v372, 2
        %v374 = vmax.f32 %v372, %v373
        %v375 = vrot.slane %v374, 1
        %v376 = vmax.f32 %v374, %v375
        %v377 = vsel %vm369, %v367, -inf
        %v378 = vrot.slane %v377, 4
        %v379 = vmax.f32 %v377, %v378
        %v380 = vrot.slane %v379, 2
        %v381 = vmax.f32 %v379, %v380
        %v382 = vrot.slane %v381, 1
        %v383 = vmax.f32 %v381, %v382
        %v386 = vcombine.low %v376, %v383
        %v388 = vsub.f32 %v363, %v386
        %v389 = vmul.f32 %v388, 1.442695
        %v390 = vpow.pop %v389
        %v392 = vcombine.high %v390, %v390
        %v394 = vsel %vm369, %v390, 0.0
        %v395 = vrot.slane %v394, 4
        %v396 = vadd.f32 %v394, %v395
        %v397 = vrot.slane %v396, 2
        %v398 = vadd.f32 %v396, %v397
        %v399 = vrot.slane %v398, 1
        %v400 = vadd.f32 %v398, %v399
        %v401 = vsel %vm369, %v392, 0.0
        %v402 = vrot.slane %v401, 4
        %v403 = vadd.f32 %v401, %v402
        %v404 = vrot.slane %v403, 2
        %v405 = vadd.f32 %v403, %v404
        %v406 = vrot.slane %v405, 1
        %v407 = vadd.f32 %v405, %v406
        %v408 = vrcp.pop %v400
        %v409 = vrcp.pop %v407
        %v412 = vcombine.low %v408, %v409
        %v414 = vmul.f32 %v390, %v412
        %v415 = vlaneseq
        %v416 = vshrl.u32 %v415, 7
        %v417 = vlaneseq
        %v418 = vshrl.u32 %v417, 7
        %v419 = vsub.s32 0, %v418
        %v420 = vrot.slane %v364, %v419
        %v421 = vlaneseq
        %v422 = vshrl.u32 %v421, 7
        %v423 = vsub.s32 1, %v422
        %v424 = vrot.slane %v364, %v423
        %vm425 = vcmp.eq.s32.totalorder %v416, %v420
        %vm426 = vcmp.eq.s32.totalorder %v416, %v424
        %v427 = vsel %vm425, 1, 0
        %v428 = vsel %vm426, 1, 0
        %v429 = vcvt.s32.f32 %v427
        %v430 = vcvt.s32.f32 %v428
        %v431 = vld [vmem:[%s326] sm:$0xff]
        %v434 = vcombine.low %v429, %v430
        %v436 = vmul.f32 %v414, %v434
        %v437 = vadd.f32 %v431, %v436
        %438 = vst [vmem:[%s326] sm:$0xff] %v437
        %v439 = vld [vmem:[%s333] sm:$0xff]
        %v440 = vadd.f32 %v414, %v434
        %v441 = vadd.f32 %v439, %v440
        %442 = vst [vmem:[%s333] sm:$0xff] %v441
        %v443 = vlog2.pop %v400
        %v444 = vmul.f32 %v443, 0.6931472
        %v445 = vlog2.pop %v407
        %v446 = vmul.f32 %v445, 0.6931472
        %v447 = vadd.f32 %v376, %v444
        %v448 = vadd.f32 %v383, %v446
        %v449 = vmul.f32 %v363, %v434
        %v451 = vcombine.high %v449, %v449
        %v453 = vsel %vm369, %v449, 0.0
        %v454 = vrot.slane %v453, 4
        %v455 = vadd.f32 %v453, %v454
        %v456 = vrot.slane %v455, 2
        %v457 = vadd.f32 %v455, %v456
        %v458 = vrot.slane %v457, 1
        %v459 = vadd.f32 %v457, %v458
        %v460 = vsel %vm369, %v451, 0.0
        %v461 = vrot.slane %v460, 4
        %v462 = vadd.f32 %v460, %v461
        %v463 = vrot.slane %v462, 2
        %v464 = vadd.f32 %v462, %v463
        %v465 = vrot.slane %v464, 1
        %v466 = vadd.f32 %v464, %v465
        %v467 = vld [vmem:[%s340] sm:$0x3]
        %v468 = vsub.f32 %v447, %v459
        %v469 = vsub.f32 %v448, %v466
        %v471 = vlaneseq
        %v472 = vshrl.u32 %v471, 7
        %v473 = vsub.s32 0, %v472
        %v474 = vrot.slane %v365, %v473
        %v475 = vlaneseq
        %v476 = vshrl.u32 %v475, 7
        %v477 = vsub.s32 1, %v476
        %v478 = vrot.slane %v365, %v477
        %v481 = vmul.f32 %v468, %v474
        %v482 = vmul.f32 %v469, %v478
        %v485 = vcombine.low %v481, %v482
        %v487 = vunpack.c.l.s4 1966171168
        %v488 = vunpack.c.0.s8 %v487
        %v489 = vlaneseq
        %v490 = vshrl.u32 %v489, 7
        %v491 = vsub.s32 %v488, %v490
        %v492 = vrot.slane %v485, %v491
        %v494 = vunpack.c.l.s4 1966171168
        %v495 = vunpack.c.0.s8 %v494
        %v496 = vlaneseq
        %v497 = vshrl.u32 %v496, 7
        %v498 = vsub.s32 %v495, %v497
        %v499 = vrot.slane %v492, %v498
        %v501 = vadd.f32 %v467, %v499
        %v502 = vlaneseq
        %vm503 = vcmp.ge.s32.totalorder %v502, 0
        %vm504 = vcmp.lt.s32.totalorder %v502, 256
        %vm505 = vmand %vm503, %vm504
        %506 = vst.msk [vmem:[%s340] sm:$0x3] %vm505, %v501
        %s507 = sand.u32 %s133, 1
        %s508 = scalar_lea.sflag [#allocation4], %s507
        %s509 = sand.u32 %s133, 1
        %s510 = smul.addr %s509, 8
        %s511 = scalar_lea.vmem [#allocation7], %s510
        %s512 = sand.u32 %s29, 1
        %s513 = scalar_lea.sflag [#allocation9], %s512
        %s514 = sand.u32 %s159, 1
        %s515 = smul.addr %s514, 8
        %s516 = scalar_lea.vmem [#allocation8], %s515
        %s517 = sand.u32 %s29, 1
        %s518 = scalar_lea.sflag [#allocation9], %s517
        %s519 = sand.u32 %s185, 1
        %s520 = smul.addr %s519, 2
        %s521 = scalar_lea.vmem [#allocation10], %s520
        // Predicated region
        $region45: #{tpu_custom_call.1} parent=31 // pred_check
          %p522 = pneg %p143
        $region46: #{tpu_custom_call.1} parent=31 // pred_check_branch
          %524 = sbr.rel (%p522) target = $region48
        $region47: #{tpu_custom_call.1} parent=31 // pred_region
          %s526 = ssub.s32 128, 128
          %527 = vsyncadd %s508, %s526
          %s528 = smul.addr %s33, 2
          %s529 = smul.addr %s528, 64
          %s530 = scalar_lea.hbm %s3, %s529
          %s532 = sshll.u32 %s511, 4
          %s533 = int_to_ptr.vmem [resolvable:$true] %s532
          %535 = dma.vmem_to_hbm [thread:$0]  %s533, 128, %s530, %s508
        $region48: #{tpu_custom_call.1} parent=31 // pred_fallthru
          _
        // Predicated region
        $region49: #{tpu_custom_call.1} parent=31 // pred_check
          %p536 = pneg %p169
        $region50: #{tpu_custom_call.1} parent=31 // pred_check_branch
          %538 = sbr.rel (%p536) target = $region52
        $region51: #{tpu_custom_call.1} parent=31 // pred_region
          %s540 = ssub.s32 128, 128
          %541 = vsyncadd %s513, %s540
          %s542 = smul.addr %s33, 2
          %s543 = smul.addr %s542, 64
          %s544 = scalar_lea.hbm %s4, %s543
          %s546 = sshll.u32 %s516, 4
          %s547 = int_to_ptr.vmem [resolvable:$true] %s546
          %549 = dma.vmem_to_hbm [thread:$0]  %s547, 128, %s544, %s513
        $region52: #{tpu_custom_call.1} parent=31 // pred_fallthru
          _
        // Predicated region
        $region53: #{tpu_custom_call.1} parent=31 // pred_check
          %p550 = pneg %p195
        $region54: #{tpu_custom_call.1} parent=31 // pred_check_branch
          %552 = sbr.rel (%p550) target = $region56
        $region55: #{tpu_custom_call.1} parent=31 // pred_region
          %s554 = ssub.s32 32, 32
          %555 = vsyncadd %s518, %s554
          %s556 = smul.addr %s33, 2
          %s557 = smul.addr %s556, 16
          %s558 = scalar_lea.hbm %s5, %s557
          %s560 = sshll.u32 %s521, 4
          %s561 = int_to_ptr.vmem [resolvable:$true] %s560
          %563 = dma.vmem_to_hbm [thread:$0]  %s561, 32, %s558, %s518
        $region56: #{tpu_custom_call.1} parent=31 // pred_fallthru
          _
      $region32: #{tpu_custom_call.1} parent=5 // pred_fallthru
        _
      %p564 = scmp.le.s32.totalorder 2, %s24
      // Predicated region
      $region57: #{tpu_custom_call.1} parent=5 // pred_check
        %p565 = pneg %p564
      $region58: #{tpu_custom_call.1} parent=5 // pred_check_branch
        %567 = sbr.rel (%p565) target = $region60
      $region59: #{tpu_custom_call.1} parent=5 // pred_region
        %s568 = ssub.s32 %s24, 2
        // Predicated region
        $region61: #{tpu_custom_call.1} parent=59 // pred_check
          %p569 = pneg %p149
        $region62: #{tpu_custom_call.1} parent=59 // pred_check_branch
          %571 = sbr.rel (%p569) target = $region64
        $region63: #{tpu_custom_call.1} parent=59 // pred_region
          %s572 = sand.u32 %s134, 1
          %s573 = scalar_lea.sflag [#allocation4], %s572
          %s574 = sand.u32 %s134, 1
          %s575 = smul.addr %s574, 8
          %s576 = scalar_lea.vmem [#allocation7], %s575
          %577 = dma.done %s573, 128
        $region64: #{tpu_custom_call.1} parent=59 // pred_fallthru
          _
        // Predicated region
        $region65: #{tpu_custom_call.1} parent=59 // pred_check
          %p578 = pneg %p175
        $region66: #{tpu_custom_call.1} parent=59 // pred_check_branch
          %580 = sbr.rel (%p578) target = $region68
        $region67: #{tpu_custom_call.1} parent=59 // pred_region
          %s581 = sand.u32 %s30, 1
          %s582 = scalar_lea.sflag [#allocation9], %s581
          %s583 = sand.u32 %s160, 1
          %s584 = smul.addr %s583, 8
          %s585 = scalar_lea.vmem [#allocation8], %s584
          %586 = dma.done %s582, 128
        $region68: #{tpu_custom_call.1} parent=59 // pred_fallthru
          _
        // Predicated region
        $region69: #{tpu_custom_call.1} parent=59 // pred_check
          %p587 = pneg %p201
        $region70: #{tpu_custom_call.1} parent=59 // pred_check_branch
          %589 = sbr.rel (%p587) target = $region72
        $region71: #{tpu_custom_call.1} parent=59 // pred_region
          %s590 = sand.u32 %s30, 1
          %s591 = scalar_lea.sflag [#allocation9], %s590
          %s592 = sand.u32 %s186, 1
          %s593 = smul.addr %s592, 2
          %s594 = scalar_lea.vmem [#allocation10], %s593
          %595 = dma.done %s591, 32
        $region72: #{tpu_custom_call.1} parent=59 // pred_fallthru
          _
      $region60: #{tpu_custom_call.1} parent=5 // pred_fallthru
        _
    $region6: #{tpu_custom_call.1} parent=1 // loop_footer
      %s28 = sadd.s32 1, %s24
    $region7: #{tpu_custom_call.1} parent=1 // loop_footer_branch
      %23 = sbr.rel target = $region3
    $region8: #{tpu_custom_call.1} parent=1 // loop_exit
      _
    %596 = vsyncpa [#allocation3], 1
    %s597 = scalar_lea.sflag [#allocation3], 1
    %598 = vsyncpa %s597, 1
    %599 = vsyncpa [#allocation6], 1
    %s600 = scalar_lea.sflag [#allocation6], 1
    %601 = vsyncpa %s600, 1
    %602 = vsyncpa [#allocation4], 1
    %s603 = scalar_lea.sflag [#allocation4], 1
    %604 = vsyncpa %s603, 1
    %605 = vsyncpa [#allocation9], 1
    %s606 = scalar_lea.sflag [#allocation9], 1
    %607 = vsyncpa %s606, 1

</llo_original>
